<compile_context>
chip_gen: v7x
topology: tpu7x:2x2x1
jax: 0.10.0
libtpu: 0.0.40
codegen_flags: <defaults>
</compile_context>

<pallas_src>
import functools

import jax
import jax.numpy as jnp
from jax.experimental import pallas as pl
from jax.experimental.pallas import tpu as pltpu

LN_EPS = 1e-5  # PyTorch nn.LayerNorm default eps


def _gelu(x):
    # TODO(synk): PyTorch nn.GELU() default is the exact erf-based GELU; the tanh
    # approximation is used inside the Pallas kernel (erf is not reliably lowerable
    # in Mosaic; max abs diff ~1e-3).  The XLA-side drift MLP uses exact erf GELU.
    c = 0.7978845608028654  # sqrt(2/pi)
    return 0.5 * x * (1.0 + jnp.tanh(c * (x + 0.044715 * x * x * x)))


def _layernorm(x, gamma, beta):
    # One-pass statistics (sum, sum-of-squares) so x is swept one fewer time than
    # the two-pass mean/var form; everything stays f32 (v5e-safe numerics).
    n = x.shape[-1]
    inv_n = 1.0 / n
    s1 = jnp.sum(x, axis=-1, keepdims=True)
    s2 = jnp.sum(x * x, axis=-1, keepdims=True)
    mu = s1 * inv_n
    var = jnp.maximum(s2 * inv_n - mu * mu, 0.0)
    return (x - mu) * jax.lax.rsqrt(var + LN_EPS) * gamma + beta


# --------------------------- VMEM budget / tiling ----------------------------
def _vmem_budget_bytes():
    """Per-chip VMEM budget (bytes) used for tile selection and vmem_limit_bytes."""
    try:
        cap = int(pltpu.get_tpu_info().vmem_capacity_bytes)
    except Exception:
        cap = 64 * 1024 * 1024  # conservative fallback (v7x physical VMEM per TC)
    return int(min(max(cap * 3 // 4, 32 * 1024 * 1024), 100 * 1024 * 1024))


@functools.lru_cache(maxsize=None)
def _single_buffer_mode():
    """Return pl.Buffered(1) if single-buffered constant parameter blocks lower and
    run on this jax/Mosaic build, else None (default double-buffering)."""
    if not hasattr(pl, "Buffered"):
        return None
    try:
        mode = pl.Buffered(1)

        def probe_kernel(x_ref, o_ref):
            o_ref[...] = x_ref[...] + 1.0

        out = pl.pallas_call(
            probe_kernel,
            out_shape=jax.ShapeDtypeStruct((8, 128), jnp.float32),
            grid=(2,),
            in_specs=[pl.BlockSpec((8, 128), lambda i: (0, 0), pipeline_mode=mode)],
            out_specs=pl.BlockSpec((8, 128), lambda i: (0, 0)),
        )(jnp.zeros((8, 128), jnp.float32))
        jax.block_until_ready(out)
        return mode
    except Exception:
        return None


def _row_align(in_bytes):
    # Sublane packing: f32 -> 8 rows, bf16 -> 16, int8/fp8 -> 32.
    if in_bytes >= 4:
        return 8
    if in_bytes == 2:
        return 16
    return 32


def _round_up(x, m):
    return ((x + m - 1) // m) * m


def _pick_tm(M, H, Bn, in_bytes, w_bytes, budget, param_copies, row_align):
    """Largest token tile whose working set fits the VMEM budget, with >=2 grid
    steps whenever M allows (keeps both v7x TensorCores busy)."""
    weight_bytes = param_copies * (w_bytes * (H * Bn + Bn * H) + 4 * (3 * Bn + 3 * H))
    best = row_align
    for cand in (4096, 2048, 1024, 512, 256, 128, 64, 32, 16):
        if cand > 1024 and H > 1024:
            continue  # very tall tiles only pay off when H is small
        if cand < row_align:
            continue
        tile_bytes = 2 * 2 * cand * H * in_bytes      # input + output tiles, double-buffered
        interm = 4 * cand * max(H, Bn) * 4            # rough f32 temporaries in the body
        if weight_bytes + tile_bytes + interm <= budget:
            best = cand
            break
    if M <= best:
        # Everything fits in one tile; still split into >=2 steps so v7x's second
        # TensorCore isn't idle (no effect on single-TC v5e/v6e beyond ~0.35us).
        if M >= 2 * row_align:
            return min(_round_up(pl.cdiv(M, 2), row_align), M)
        return M
    return best


# ------------------------------ adapter kernel -------------------------------
def adapter_kernel(x_ref, w1_ref, b1_ref, g1_ref, be1_ref,
                   w2_ref, b2_ref, g2_ref, be2_ref, o_ref):
    x = x_ref[...]                                                     # (tm, H), input dtype
    # Matmuls in the weight dtype (bf16 by default), f32 accumulation on the MXU.
    h = jnp.dot(x.astype(w1_ref.dtype), w1_ref[...],
                preferred_element_type=jnp.float32) + b1_ref[...]
    h = _layernorm(h, g1_ref[...], be1_ref[...])                       # LayerNorm(bottleneck), f32
    h = _gelu(h)
    y = jnp.dot(h.astype(w2_ref.dtype), w2_ref[...],
                preferred_element_type=jnp.float32) + b2_ref[...]
    y = _layernorm(y, g2_ref[...], be2_ref[...])                       # LayerNorm(hidden), f32
    # nn.Dropout is the identity in the forward/inference pass.
    o_ref[...] = (x.astype(jnp.float32) + y).astype(o_ref.dtype)       # residual, explicit cast


def apply_adapter(x2d, p, tm=None, compute_dtype=jnp.bfloat16, donate_input=False):
    M, H = x2d.shape
    Bn = p["w1"].shape[1]
    in_bytes = x2d.dtype.itemsize

    mm_dtype = jnp.dtype(compute_dtype) if compute_dtype is not None else x2d.dtype
    w_bytes = mm_dtype.itemsize
    w1 = p["w1"].astype(mm_dtype)
    w2 = p["w2"].astype(mm_dtype)

    buf_mode = _single_buffer_mode()
    param_copies = 1 if buf_mode is not None else 2

    budget = _vmem_budget_bytes()
    if tm is None:
        tm = _pick_tm(M, H, Bn, in_bytes, w_bytes, budget, param_copies,
                      _row_align(in_bytes))

    grid = (pl.cdiv(M, tm),)
    const = lambda i: (0, 0)

    def param_spec(shape):
        # Constant-index parameter blocks: single-buffer them when supported so the
        # saved VMEM goes into a bigger token tile.
        if buf_mode is not None:
            return pl.BlockSpec(shape, const, pipeline_mode=buf_mode)
        return pl.BlockSpec(shape, const)

    cost = pl.CostEstimate(
        flops=int(4 * M * H * Bn),                     # two (M,H,Bn) matmuls
        transcendentals=int(M * Bn + 2 * M),           # tanh (GELU) + rsqrt (LN)
        bytes_accessed=int(2 * M * H * in_bytes
                           + w_bytes * (H * Bn + Bn * H)
                           + 4 * (3 * Bn + 3 * H)),
    )

    extra = {"input_output_aliases": {0: 0}} if donate_input else {}

    return pl.pallas_call(
        adapter_kernel,
        out_shape=jax.ShapeDtypeStruct((M, H), x2d.dtype),
        grid=grid,
        in_specs=[
            pl.BlockSpec((tm, H), lambda i: (i, 0)),   # tokens tile
            param_spec((H, Bn)),                       # W1
            param_spec((1, Bn)),                       # b1
            param_spec((1, Bn)),                       # LN1 gamma
            param_spec((1, Bn)),                       # LN1 beta
            param_spec((Bn, H)),                       # W2
            param_spec((1, H)),                        # b2
            param_spec((1, H)),                        # LN2 gamma
            param_spec((1, H)),                        # LN2 beta
        ],
        out_specs=pl.BlockSpec((tm, H), lambda i: (i, 0)),
        compiler_params=pltpu.CompilerParams(
            dimension_semantics=("parallel",),
            vmem_limit_bytes=budget,
        ),
        cost_estimate=cost,
        **extra,
    )(x2d, w1, p["b1"], p["g1"], p["be1"], w2, p["b2"], p["g2"], p["be2"])


# --------------------------- drift detector ----------------------------------
def seq_mean_kernel(x_ref, o_ref, sum_acc, *, seq_len, chunk, ragged):
    # NOTE: the reduction (seq-chunk) axis is the LAST grid axis, which Pallas TPU
    # iterates innermost; the j == 0 reset below relies on that ordering.
    j = pl.program_id(1)
    nj = pl.num_programs(1)

    @pl.when(j == 0)
    def _():
        sum_acc[...] = jnp.zeros_like(sum_acc)

    x = x_ref[...].astype(jnp.float32)                    # (1, chunk, H)
    if ragged:  # static: only emitted when S % chunk != 0
        pos = j * chunk + jax.lax.broadcasted_iota(jnp.int32, (1, chunk, 1), 1)
        x = jnp.where(pos < seq_len, x, 0.0)
    sum_acc[...] += jnp.sum(x, axis=1, keepdims=True)     # running seq sum -> (1, 1, H)

    @pl.when(j == nj - 1)
    def _():
        o_ref[...] = sum_acc[...] * (1.0 / seq_len)       # per-batch seq mean


def apply_drift(x, p):
    """drift_detector(hidden_states.mean(dim=1)).mean() -> scalar."""
    B, S, H = x.shape
    chunk = S if S <= 512 else 512
    ragged = (S % chunk) != 0
    grid = (B, pl.cdiv(S, chunk))                         # reduction (seq) axis last

    kernel = functools.partial(seq_mean_kernel, seq_len=S, chunk=chunk, ragged=ragged)
    means = pl.pallas_call(
        kernel,
        out_shape=jax.ShapeDtypeStruct((B, 1, H), jnp.float32),
        grid=grid,
        in_specs=[pl.BlockSpec((1, chunk, H), lambda b, j: (b, j, 0))],
        out_specs=pl.BlockSpec((1, 1, H), lambda b, j: (b, 0, 0)),
        scratch_shapes=[pltpu.VMEM((1, 1, H), jnp.float32)],
        compiler_params=pltpu.CompilerParams(
            dimension_semantics=("parallel", "arbitrary"),
            vmem_limit_bytes=_vmem_budget_bytes(),
        ),
    )(x).reshape(B, H)

    # Tiny MLP + sigmoid + batch mean on the (B, H) means in plain XLA: keeps the
    # (H, H//4) weight out of kernel VMEM entirely and uses exact erf GELU.
    h = jax.nn.gelu(means @ p["dw1"] + p["db1"], approximate=False)    # (B, H//4)
    scores = jax.nn.sigmoid(h @ p["dw2"] + p["db2"])                   # (B, 1)
    return jnp.mean(scores)


# ------------------------------ module wrapper --------------------------------
def init_params(key, hidden_size, bottleneck):
    # Config tip: pick bottleneck (and hidden_size//4) as multiples of 256 on
    # v6e/v7x (256x256 MXU), 128 on v5e; the kernels are correct for any size.
    H, Bn = hidden_size, bottleneck
    Hd = max(1, hidden_size // 4)
    k1, k2, k3, k4 = jax.random.split(key, 4)
    scale = 0.02
    return dict(
        # adapter: Linear(H,Bn) -> LayerNorm(Bn) -> GELU -> Linear(Bn,H) -> LayerNorm(H) -> Dropout
        w1=jax.random.normal(k1, (H, Bn), jnp.float32) * scale,
        b1=jnp.zeros((1, Bn), jnp.float32),
        g1=jnp.ones((1, Bn), jnp.float32),
        be1=jnp.zeros((1, Bn), jnp.float32),
        w2=jax.random.normal(k2, (Bn, H), jnp.float32) * scale,
        b2=jnp.zeros((1, H), jnp.float32),
        g2=jnp.ones((1, H), jnp.float32),
        be2=jnp.zeros((1, H), jnp.float32),
        # drift detector: Linear(H, H//4) -> GELU -> Linear(H//4, 1) -> Sigmoid
        dw1=jax.random.normal(k3, (H, Hd), jnp.float32) * scale,
        db1=jnp.zeros((1, Hd), jnp.float32),
        dw2=jax.random.normal(k4, (Hd, 1), jnp.float32) * scale,
        db2=jnp.zeros((1, 1), jnp.float32),
    )


def continual_adapter_forward(hidden_states, params, update=False,
                              compute_dtype=jnp.bfloat16, donate_input=False):
    """Matches ContinualAdapter.forward (inference semantics; task_id branch is a no-op).

    Perf note: the adapter is HBM-bandwidth-bound — feed bf16 hidden_states produced
    upstream in bf16 (not cast here) for ~2x wall-clock on v5e/v6e.
    """
    B, S, H = hidden_states.shape
    _single_buffer_mode()  # run the one-time Buffered(1) feature probe eagerly

    def run_adapter(x):
        x2d = x.reshape(B * S, H)
        return apply_adapter(x2d, params, compute_dtype=compute_dtype,
                             donate_input=donate_input).reshape(B, S, H)

    if update:
        return run_adapter(hidden_states)

    drift = apply_drift(hidden_states, params)
    # torch short-circuit: drift < 0.5 -> return hidden_states untouched (adapter
    # pallas_call and its full HBM pass are skipped); otherwise residual + adapter.
    return jax.lax.cond(drift < 0.5, lambda x: x, run_adapter, hidden_states)


if __name__ == "__main__":
    key = jax.random.PRNGKey(0)
    kx, kp = jax.random.split(key)
    B, S, H, BOTTLENECK = 2, 8, 32, 64
    x = jax.random.normal(kx, (B, S, H), jnp.float32)
    params = init_params(kp, H, BOTTLENECK)

    out_eval = continual_adapter_forward(x, params, update=False)
    out_update = continual_adapter_forward(x, params, update=True)
    jax.block_until_ready((out_eval, out_update))

    assert out_eval.shape == x.shape and out_update.shape == x.shape
    assert out_eval.dtype == x.dtype and out_update.dtype == x.dtype
    assert bool(jnp.all(jnp.isfinite(out_update)))
    print("KERNEL_OK")
</pallas_src>

<mosaic_0001>
module attributes {stable_mosaic.version = 11 : i64} {
  func.func @probe_kernel(%arg0: i32, %arg1: memref<8x128xf32, #tpu.memory_space<vmem>>, %arg2: memref<8x128xf32, #tpu.memory_space<vmem>>) attributes {dimension_semantics = [#tpu.dimension_semantics<arbitrary>], iteration_bounds = array<i64: 2>, scalar_prefetch = 0 : i64, scratch_operands = 0 : i64, tpu.core_type = #tpu.core_type<tc>, window_params = [{pipeline_mode = #tpu.pipeline_mode<synchronous>, transform_indices = @transform_0, window_bounds = array<i64: 8, 128>}, {pipeline_mode = #tpu.pipeline_mode<synchronous>, transform_indices = @transform_1, window_bounds = array<i64: 8, 128>}]} {
    %c0 = arith.constant 0 : index
    %c0_0 = arith.constant 0 : index
    %0 = vector.load %arg1[%c0, %c0_0] : memref<8x128xf32, #tpu.memory_space<vmem>>, vector<8x128xf32>
    %cst = arith.constant 1.000000e+00 : f32
    %1 = vector.broadcast %cst : f32 to vector<8x128xf32>
    %2 = arith.addf %0, %1 : vector<8x128xf32>
    %c0_1 = arith.constant 0 : index
    %c0_2 = arith.constant 0 : index
    %3 = vector.load %arg2[%c0_1, %c0_2] : memref<8x128xf32, #tpu.memory_space<vmem>>, vector<8x128xf32>
    tpu.vector_store %arg2[%c0_1, %c0_2], %2 {strides = array<i32>} : memref<8x128xf32, #tpu.memory_space<vmem>>, vector<8x128xf32>,
    return
  }
  func.func @transform_0(%arg0: i32) -> (i32, i32) {
    %c0_i32 = arith.constant 0 : i32
    %c0_i32_0 = arith.constant 0 : i32
    %c0_i32_1 = arith.constant 0 : i32
    return %c0_i32, %c0_i32_0 : i32, i32
  }
  func.func @transform_1(%arg0: i32) -> (i32, i32) {
    %c0_i32 = arith.constant 0 : i32
    %c0_i32_0 = arith.constant 0 : i32
    %c0_i32_1 = arith.constant 0 : i32
    return %c0_i32, %c0_i32_0 : i32, i32
  }
}

module attributes {stable_mosaic.version = 11 : i64} {
  func.func @seq_mean_kernel(%arg0: i32, %arg1: i32, %arg2: memref<1x8x32xf32, #tpu.memory_space<vmem>>, %arg3: memref<1x1x32xf32, #tpu.memory_space<vmem>>, %arg4: memref<1x1x32xf32, #tpu.memory_space<vmem>>) attributes {dimension_semantics = [#tpu.dimension_semantics<parallel>, #tpu.dimension_semantics<arbitrary>], iteration_bounds = array<i64: 2, 1>, scalar_prefetch = 0 : i64, scratch_operands = 1 : i64, tpu.core_type = #tpu.core_type<tc>, window_params = [{transform_indices = @transform_0, window_bounds = array<i64: 1, 8, 32>}, {transform_indices = @transform_1, window_bounds = array<i64: 1, 1, 32>}]} {
    %c0_i32 = arith.constant 0 : i32
    %0 = arith.cmpi eq, %arg1, %c0_i32 : i32
    %1 = arith.extui %0 : i1 to i32
    %c0_i32_0 = arith.constant 0 : i32
    %2 = arith.cmpi ne, %1, %c0_i32_0 : i32
    scf.if %2 {
      %cst_11 = arith.constant 0.000000e+00 : f32
      %12 = vector.broadcast %cst_11 : f32 to vector<1x1x32xf32>
      %c0_12 = arith.constant 0 : index
      %c0_13 = arith.constant 0 : index
      %c0_14 = arith.constant 0 : index
      %13 = vector.load %arg4[%c0_12, %c0_13, %c0_14] : memref<1x1x32xf32, #tpu.memory_space<vmem>>, vector<1x1x32xf32>
      tpu.vector_store %arg4[%c0_12, %c0_13, %c0_14], %12 {strides = array<i32>} : memref<1x1x32xf32, #tpu.memory_space<vmem>>, vector<1x1x32xf32>,
    } else {
    }
    %c0 = arith.constant 0 : index
    %c0_1 = arith.constant 0 : index
    %c0_2 = arith.constant 0 : index
    %3 = vector.load %arg2[%c0, %c0_1, %c0_2] : memref<1x8x32xf32, #tpu.memory_space<vmem>>, vector<1x8x32xf32>
    %c0_3 = arith.constant 0 : index
    %c0_4 = arith.constant 0 : index
    %c0_5 = arith.constant 0 : index
    %4 = vector.load %arg4[%c0_3, %c0_4, %c0_5] : memref<1x1x32xf32, #tpu.memory_space<vmem>>, vector<1x1x32xf32>
    %cst = arith.constant dense<0.000000e+00> : vector<1x32xf32>
    %5 = vector.multi_reduction <add>, %3, %cst [1] : vector<1x8x32xf32> to vector<1x32xf32>
    %6 = vector.shape_cast %5 : vector<1x32xf32> to vector<1x1x32xf32>
    %7 = arith.addf %4, %6 : vector<1x1x32xf32>
    %c0_6 = arith.constant 0 : index
    %c0_7 = arith.constant 0 : index
    %c0_8 = arith.constant 0 : index
    %8 = vector.load %arg4[%c0_6, %c0_7, %c0_8] : memref<1x1x32xf32, #tpu.memory_space<vmem>>, vector<1x1x32xf32>
    tpu.vector_store %arg4[%c0_6, %c0_7, %c0_8], %7 {strides = array<i32>} : memref<1x1x32xf32, #tpu.memory_space<vmem>>, vector<1x1x32xf32>,
    %c0_i32_9 = arith.constant 0 : i32
    %9 = arith.cmpi eq, %arg1, %c0_i32_9 : i32
    %10 = arith.extui %9 : i1 to i32
    %c0_i32_10 = arith.constant 0 : i32
    %11 = arith.cmpi ne, %10, %c0_i32_10 : i32
    scf.if %11 {
      %c0_11 = arith.constant 0 : index
      %c0_12 = arith.constant 0 : index
      %c0_13 = arith.constant 0 : index
      %12 = vector.load %arg4[%c0_11, %c0_12, %c0_13] : memref<1x1x32xf32, #tpu.memory_space<vmem>>, vector<1x1x32xf32>
      %cst_14 = arith.constant 1.250000e-01 : f32
      %13 = vector.broadcast %cst_14 : f32 to vector<1x1x32xf32>
      %14 = arith.mulf %12, %13 : vector<1x1x32xf32>
      %c0_15 = arith.constant 0 : index
      %c0_16 = arith.constant 0 : index
      %c0_17 = arith.constant 0 : index
      %15 = vector.load %arg3[%c0_15, %c0_16, %c0_17] : memref<1x1x32xf32, #tpu.memory_space<vmem>>, vector<1x1x32xf32>
      tpu.vector_store %arg3[%c0_15, %c0_16, %c0_17], %14 {strides = array<i32>} : memref<1x1x32xf32, #tpu.memory_space<vmem>>, vector<1x1x32xf32>,
    } else {
    }
    return
  }
  func.func @transform_0(%arg0: i32, %arg1: i32) -> (i32, i32, i32) {
    %c0_i32 = arith.constant 0 : i32
    %c0_i32_0 = arith.constant 0 : i32
    return %arg0, %arg1, %c0_i32 : i32, i32, i32
  }
  func.func @transform_1(%arg0: i32, %arg1: i32) -> (i32, i32, i32) {
    %c0_i32 = arith.constant 0 : i32
    %c0_i32_0 = arith.constant 0 : i32
    %c0_i32_1 = arith.constant 0 : i32
    return %arg0, %c0_i32, %c0_i32_0 : i32, i32, i32
  }
}

</mosaic_0001>

<llo_original>
// kernel: tpu_custom_call.1
$region0: #{tpu_custom_call.1}
  #allocation0 [shape = 'u32[]', space=smem, size = 0x4, offset = 0x4, fixed_abs, tag = 'smem constant byte address 0x4 - core index']
  #allocation1 [shape = 'u32[144,128]{1,0:T(1,128)}', space=vmem, size = 0x12000, scoped, tag = 'internal scratch']
  %s0 = inlined_call_operand.hbm [shape: f32[8,128], index: 0, kind: input, shape index: {}]
  %s1 = inlined_call_operand.hbm [shape: f32[8,128], index: 1, kind: output, shape index: {}]
  %s2 = sld [smem:[#allocation0]]
  $region41: #{tpu_custom_call.1} parent=0
    _
  %s4 = ssub.s32 1, %s2
  %s5 = scalar_select 0, %s4, %s2
  $region1: #{tpu_custom_call.1} parent=0
    #allocation2 [shape = 'u8[4096]{0}', space=vmem, size = 0x1000, scoped, tag = 'input window, operand 0, single buffered']
    #allocation3 [shape = 's32[2]{0}', space=sflag, size = 0x8, scoped, tag = 'scoped memory for tpu_custom_call.1']
    #allocation4 [shape = 's32[2]{0}', space=sflag, size = 0x8, scoped, tag = 'scoped memory for tpu_custom_call.1']
    #allocation5 [shape = 'u8[4096]{0}', space=vmem, size = 0x1000, scoped, tag = 'output window, operand 0, single buffered']
    %6 = vsyncpa [#allocation3], 0
    %7 = vsyncpa [#allocation4], 0
    loop: start=0, step=1, limit=4
    $region2: #{tpu_custom_call.1} parent=1 // loop_pre_header
      _
    $region3: #{tpu_custom_call.1} parent=1 // loop_header
      %s9 = sphi 0, %s13
      %p10 = scmp.ge.s32.totalorder %s9, 4
      %s17 = sphi 0, %s17
      %s19 = sphi 0, %s17
      %s20 = sphi 0, %s19
      %s34 = sphi 0, %s20
      %s38 = sphi 0, %s38
      %s40 = sphi 0, %s38
      %s41 = sphi 0, %s40
      %s55 = sphi 0, %s41
    $region4: #{tpu_custom_call.1} parent=1 // loop_header_branch
      %12 = sbr.rel (%p10) target = $region8
    $region5: #{tpu_custom_call.1} parent=1 // loop_body
      %s14 = ssub.s32 %s9, 1
      %s15 = ssub.s32 %s9, 2
      %s16 = sadd.s32 %s9, 1
      %s18 = sadd.s32 %s17, 1
      %p21 = scmp.eq.s32.totalorder %s9, 1
      %p22 = scmp.ne.s32.totalorder %s17, %s19
      %p23 = scmp.eq.s32.totalorder %s9, 0
      %p24 = por %p22, %p23
      %p25 = scmp.ne.s32.totalorder %s17, %s19
      %p26 = scmp.eq.s32.totalorder %s14, 1
      %p27 = por %p25, %p26
      %p28 = scmp.ne.s32.totalorder %s19, %s20
      %p29 = scmp.eq.s32.totalorder %s14, 0
      %p30 = por %p28, %p29
      %p31 = scmp.ne.s32.totalorder %s19, %s20
      %p32 = scmp.eq.s32.totalorder %s15, 1
      %p33 = por %p31, %p32
      %p35 = scmp.ne.s32.totalorder %s20, %s34
      %p36 = scmp.eq.s32.totalorder %s15, 0
      %p37 = por %p35, %p36
      %s39 = sadd.s32 %s38, 1
      %p42 = scmp.eq.s32.totalorder %s9, 1
      %p43 = scmp.ne.s32.totalorder %s38, %s40
      %p44 = scmp.eq.s32.totalorder %s9, 0
      %p45 = por %p43, %p44
      %p46 = scmp.ne.s32.totalorder %s38, %s40
      %p47 = scmp.eq.s32.totalorder %s14, 1
      %p48 = por %p46, %p47
      %p49 = scmp.ne.s32.totalorder %s40, %s41
      %p50 = scmp.eq.s32.totalorder %s14, 0
      %p51 = por %p49, %p50
      %p52 = scmp.ne.s32.totalorder %s40, %s41
      %p53 = scmp.eq.s32.totalorder %s15, 1
      %p54 = por %p52, %p53
      %p56 = scmp.ne.s32.totalorder %s41, %s55
      %p57 = scmp.eq.s32.totalorder %s15, 0
      %p58 = por %p56, %p57
      %p59 = scmp.le.s32.totalorder 1, %s9
      %p60 = scmp.lt.s32.totalorder %s9, 3
      %p61 = pnand %p59, %p60
      %p62 = pneg %p61
      // Predicated region
      $region9: #{tpu_custom_call.1} parent=5 // pred_check
        _
      $region10: #{tpu_custom_call.1} parent=5 // pred_check_branch
        %64 = sbr.rel (%p61) target = $region12
      $region11: #{tpu_custom_call.1} parent=5 // pred_region
        %s65 = ssub.s32 %s9, 1
        // Predicated region
        $region13: #{tpu_custom_call.1} parent=11 // pred_check
          %p66 = pneg %p30
        $region14: #{tpu_custom_call.1} parent=11 // pred_check_branch
          %68 = sbr.rel (%p66) target = $region16
        $region15: #{tpu_custom_call.1} parent=11 // pred_region
          %s70 = ssub.s32 128, 128
          %71 = vsyncadd [#allocation3], %s70
          %s73 = sshll.u32 [#allocation2], 4
          %s74 = int_to_ptr.vmem [resolvable:$true] %s73
          %76 = dma.hbm_to_vmem [thread:$0]  %s0, 128, %s74, [#allocation3]
        $region16: #{tpu_custom_call.1} parent=11 // pred_fallthru
          _
      $region12: #{tpu_custom_call.1} parent=5 // pred_fallthru
        _
      %p77 = scmp.lt.s32.totalorder %s9, 2
      // Predicated region
      $region17: #{tpu_custom_call.1} parent=5 // pred_check
        %p78 = pneg %p77
      $region18: #{tpu_custom_call.1} parent=5 // pred_check_branch
        %80 = sbr.rel (%p78) target = $region20
      $region19: #{tpu_custom_call.1} parent=5 // pred_region
        _
      $region20: #{tpu_custom_call.1} parent=5 // pred_fallthru
        _
      %p81 = scmp.le.s32.totalorder 1, %s9
      %p82 = scmp.lt.s32.totalorder %s9, 3
      %p83 = pnand %p81, %p82
      %p84 = pneg %p83
      // Predicated region
      $region21: #{tpu_custom_call.1} parent=5 // pred_check
        _
      $region22: #{tpu_custom_call.1} parent=5 // pred_check_branch
        %86 = sbr.rel (%p83) target = $region24
      $region23: #{tpu_custom_call.1} parent=5 // pred_region
        %s87 = ssub.s32 %s9, 1
        // Predicated region
        $region25: #{tpu_custom_call.1} parent=23 // pred_check
          %p88 = pneg %p30
        $region26: #{tpu_custom_call.1} parent=23 // pred_check_branch
          %90 = sbr.rel (%p88) target = $region28
        $region27: #{tpu_custom_call.1} parent=23 // pred_region
          %91 = dma.done [#allocation3], 128
        $region28: #{tpu_custom_call.1} parent=23 // pred_fallthru
          _
        %p92 = pneg %p30
        %p93 = pneg %p27
        %p94 = pneg %p51
        %p95 = pneg %p48
        %v96 = vld [vmem:[#allocation2] sm:$0xff]
        %v97 = vadd.f32 %v96, 1.0
        %98 = vst [vmem:[#allocation5] sm:$0xff] %v97
        // Predicated region
        $region29: #{tpu_custom_call.1} parent=23 // pred_check
          %p99 = pneg %p48
        $region30: #{tpu_custom_call.1} parent=23 // pred_check_branch
          %101 = sbr.rel (%p99) target = $region32
        $region31: #{tpu_custom_call.1} parent=23 // pred_region
          %s103 = ssub.s32 128, 128
          %104 = vsyncadd [#allocation4], %s103
          %s106 = sshll.u32 [#allocation5], 4
          %s107 = int_to_ptr.vmem [resolvable:$true] %s106
          %109 = dma.vmem_to_hbm [thread:$0]  %s107, 128, %s1, [#allocation4]
        $region32: #{tpu_custom_call.1} parent=23 // pred_fallthru
          _
        // Predicated region
        $region33: #{tpu_custom_call.1} parent=23 // pred_check
          %p110 = pneg %p48
        $region34: #{tpu_custom_call.1} parent=23 // pred_check_branch
          %112 = sbr.rel (%p110) target = $region36
        $region35: #{tpu_custom_call.1} parent=23 // pred_region
          %113 = dma.done [#allocation4], 128
        $region36: #{tpu_custom_call.1} parent=23 // pred_fallthru
          _
      $region24: #{tpu_custom_call.1} parent=5 // pred_fallthru
        _
      %p114 = scmp.le.s32.totalorder 2, %s9
      // Predicated region
      $region37: #{tpu_custom_call.1} parent=5 // pred_check
        %p115 = pneg %p114
      $region38: #{tpu_custom_call.1} parent=5 // pred_check_branch
        %117 = sbr.rel (%p115) target = $region40
      $region39: #{tpu_custom_call.1} parent=5 // pred_region
        %s118 = ssub.s32 %s9, 2
      $region40: #{tpu_custom_call.1} parent=5 // pred_fallthru
        _
    $region6: #{tpu_custom_call.1} parent=1 // loop_footer
      %s13 = sadd.s32 1, %s9
    $region7: #{tpu_custom_call.1} parent=1 // loop_footer_branch
      %8 = sbr.rel target = $region3
    $region8: #{tpu_custom_call.1} parent=1 // loop_exit
      _
    %119 = vsyncpa [#allocation3], 1
    %s120 = scalar_lea.sflag [#allocation3], 1
    %121 = vsyncpa %s120, 1
    %122 = vsyncpa [#allocation4], 1
    %s123 = scalar_lea.sflag [#allocation4], 1
    %124 = vsyncpa %s123, 1

// kernel: tpu_custom_call.1
$region0: #{tpu_custom_call.1}
  #allocation0 [shape = 'u32[]', space=smem, size = 0x4, offset = 0x4, fixed_abs, tag = 'smem constant byte address 0x4 - core index']
  #allocation1 [shape = 'u32[144,128]{1,0:T(1,128)}', space=vmem, size = 0x12000, scoped, tag = 'internal scratch']
  #allocation2 [shape = 'f32[1,1,32]{2,1,0:T(1,128)}', space=vmem, size = 0x200, scoped, tag = 'scratch operand']
  %s0 = inlined_call_operand.hbm [shape: f32[2,8,32], index: 0, kind: input, shape index: {}]
  %s1 = inlined_call_operand.hbm [shape: f32[2,1,32], index: 1, kind: output, shape index: {}]
  %s2 = sld [smem:[#allocation0]]
  $region49: #{tpu_custom_call.1} parent=0
    _
  %s4 = ssub.s32 1, %s2
  %s5 = scalar_select 0, %s4, %s2
  $region1: #{tpu_custom_call.1} parent=0
    #allocation3 [shape = 'u8[8192]{0}', space=vmem, size = 0x2000, scoped, tag = 'input window, operand 0']
    #allocation4 [shape = 's32[2]{0}', space=sflag, size = 0x8, scoped, tag = 'scoped memory for tpu_custom_call.1']
    #allocation5 [shape = 's32[2]{0}', space=sflag, size = 0x8, scoped, tag = 'scoped memory for tpu_custom_call.1']
    #allocation6 [shape = 'u8[1024]{0}', space=vmem, size = 0x400, scoped, tag = 'output window, operand 0']
    %6 = vsyncpa [#allocation4], 0
    %s7 = scalar_lea.sflag [#allocation4], 1
    %8 = vsyncpa %s7, 0
    %9 = vsyncpa [#allocation5], 0
    %s10 = scalar_lea.sflag [#allocation5], 1
    %11 = vsyncpa %s10, 0
    loop: start=0, step=1, limit=4
    $region2: #{tpu_custom_call.1} parent=1 // loop_pre_header
      _
    $region3: #{tpu_custom_call.1} parent=1 // loop_header
      %s13 = sphi 0, %s17
      %p14 = scmp.ge.s32.totalorder %s13, 4
      %s20 = sphi 0, %s32
      %s21 = sphi 0, %s28
      %s22 = sphi 0, %s20
      %s23 = sphi 0, %s21
      %s24 = sphi 0, %s22
      %s25 = sphi 0, %s23
      %s37 = sphi 0, %s39
      %s40 = sphi 0, %s37
      %s41 = sphi 0, %s40
      %s57 = sphi 0, %s41
      %s63 = sphi 0, %s65
      %s66 = sphi 0, %s63
      %s67 = sphi 0, %s66
      %s83 = sphi 0, %s67
    $region4: #{tpu_custom_call.1} parent=1 // loop_header_branch
      %16 = sbr.rel (%p14) target = $region8
    $region5: #{tpu_custom_call.1} parent=1 // loop_body
      %s18 = ssub.s32 %s13, 1
      %s19 = ssub.s32 %s13, 2
      %s26 = sadd.s32 1, %s21
      %p27 = scmp.ge.s32.totalorder %s26, 1
      %s28 = scalar_select %p27, 0, %s26
      %s29 = sadd.s32 1, %s20
      %s30 = scalar_select %p27, %s29, %s20
      %p31 = scmp.ge.s32.totalorder %s30, 2
      %s32 = scalar_select %p31, 0, %s30
      %s33 = ssub.s32 %s20, %s32
      %s34 = ssub.s32 %s21, %s28
      %s35 = sor.u32 %s33, %s34
      %p36 = scmp.eq.s32.totalorder %s35, 0
      %s38 = sadd.s32 %s37, 1
      %s39 = scalar_select %p36, %s37, %s38
      %p42 = pneg %p36
      %p43 = scmp.eq.s32.totalorder %s13, 1
      %p44 = por %p42, %p43
      %p45 = scmp.ne.s32.totalorder %s37, %s40
      %p46 = scmp.eq.s32.totalorder %s13, 0
      %p47 = por %p45, %p46
      %p48 = scmp.ne.s32.totalorder %s37, %s40
      %p49 = scmp.eq.s32.totalorder %s18, 1
      %p50 = por %p48, %p49
      %p51 = scmp.ne.s32.totalorder %s40, %s41
      %p52 = scmp.eq.s32.totalorder %s18, 0
      %p53 = por %p51, %p52
      %p54 = scmp.ne.s32.totalorder %s40, %s41
      %p55 = scmp.eq.s32.totalorder %s19, 1
      %p56 = por %p54, %p55
      %p58 = scmp.ne.s32.totalorder %s41, %s57
      %p59 = scmp.eq.s32.totalorder %s19, 0
      %p60 = por %p58, %p59
      %s61 = ssub.s32 %s20, %s32
      %p62 = scmp.eq.s32.totalorder %s61, 0
      %s64 = sadd.s32 %s63, 1
      %s65 = scalar_select %p62, %s63, %s64
      %p68 = pneg %p62
      %p69 = scmp.eq.s32.totalorder %s13, 1
      %p70 = por %p68, %p69
      %p71 = scmp.ne.s32.totalorder %s63, %s66
      %p72 = scmp.eq.s32.totalorder %s13, 0
      %p73 = por %p71, %p72
      %p74 = scmp.ne.s32.totalorder %s63, %s66
      %p75 = scmp.eq.s32.totalorder %s18, 1
      %p76 = por %p74, %p75
      %p77 = scmp.ne.s32.totalorder %s66, %s67
      %p78 = scmp.eq.s32.totalorder %s18, 0
      %p79 = por %p77, %p78
      %p80 = scmp.ne.s32.totalorder %s66, %s67
      %p81 = scmp.eq.s32.totalorder %s19, 1
      %p82 = por %p80, %p81
      %p84 = scmp.ne.s32.totalorder %s67, %s83
      %p85 = scmp.eq.s32.totalorder %s19, 0
      %p86 = por %p84, %p85
      %p87 = scmp.le.s32.totalorder 1, %s13
      %p88 = scmp.lt.s32.totalorder %s13, 3
      %p89 = pnand %p87, %p88
      %p90 = pneg %p89
      // Predicated region
      $region9: #{tpu_custom_call.1} parent=5 // pred_check
        _
      $region10: #{tpu_custom_call.1} parent=5 // pred_check_branch
        %92 = sbr.rel (%p89) target = $region12
      $region11: #{tpu_custom_call.1} parent=5 // pred_region
        %s93 = ssub.s32 %s13, 1
      $region12: #{tpu_custom_call.1} parent=5 // pred_fallthru
        _
      %p94 = scmp.lt.s32.totalorder %s13, 2
      // Predicated region
      $region13: #{tpu_custom_call.1} parent=5 // pred_check
        %p95 = pneg %p94
      $region14: #{tpu_custom_call.1} parent=5 // pred_check_branch
        %97 = sbr.rel (%p95) target = $region16
      $region15: #{tpu_custom_call.1} parent=5 // pred_region
        // Predicated region
        $region17: #{tpu_custom_call.1} parent=15 // pred_check
          %p98 = pneg %p47
        $region18: #{tpu_custom_call.1} parent=15 // pred_check_branch
          %100 = sbr.rel (%p98) target = $region20
        $region19: #{tpu_custom_call.1} parent=15 // pred_region
          %s101 = sand.u32 %s37, 1
          %s102 = scalar_lea.sflag [#allocation4], %s101
          %s103 = sand.u32 %s37, 1
          %s104 = smul.addr %s103, 8
          %s105 = scalar_lea.vmem [#allocation3], %s104
          %s107 = ssub.s32 128, 128
          %108 = vsyncadd %s102, %s107
          %s109 = sadd.s32 %s21, %s20
          %s110 = smul.addr %s109, 128
          %s111 = scalar_lea.hbm %s0, %s110
          %s113 = sshll.u32 %s105, 4
          %s114 = int_to_ptr.vmem [resolvable:$true] %s113
          %116 = dma.hbm_to_vmem [thread:$0]  %s111, 128, %s114, %s102
        $region20: #{tpu_custom_call.1} parent=15 // pred_fallthru
          _
      $region16: #{tpu_custom_call.1} parent=5 // pred_fallthru
        _
      %p117 = scmp.le.s32.totalorder 1, %s13
      %p118 = scmp.lt.s32.totalorder %s13, 3
      %p119 = pnand %p117, %p118
      %p120 = pneg %p119
      // Predicated region
      $region21: #{tpu_custom_call.1} parent=5 // pred_check
        _
      $region22: #{tpu_custom_call.1} parent=5 // pred_check_branch
        %122 = sbr.rel (%p119) target = $region24
      $region23: #{tpu_custom_call.1} parent=5 // pred_region
        %s123 = ssub.s32 %s13, 1
        %s124 = sand.u32 %s40, 1
        %s125 = scalar_lea.sflag [#allocation4], %s124
        %s126 = sand.u32 %s40, 1
        %s127 = smul.addr %s126, 8
        %s128 = scalar_lea.vmem [#allocation3], %s127
        // Predicated region
        $region25: #{tpu_custom_call.1} parent=23 // pred_check
          %p129 = pneg %p53
        $region26: #{tpu_custom_call.1} parent=23 // pred_check_branch
          %131 = sbr.rel (%p129) target = $region28
        $region27: #{tpu_custom_call.1} parent=23 // pred_region
          %132 = dma.done %s125, 128
        $region28: #{tpu_custom_call.1} parent=23 // pred_fallthru
          _
        %s133 = sand.u32 %s40, 1
        %s134 = scalar_lea.sflag [#allocation4], %s133
        %s135 = sand.u32 %s40, 1
        %s136 = smul.addr %s135, 8
        %s137 = scalar_lea.vmem [#allocation3], %s136
        %p138 = pneg %p53
        %p139 = pneg %p50
        %p140 = pneg %p79
        %p141 = pneg %p76
        %s142 = sand.u32 %s66, 1
        %s143 = scalar_lea.sflag [#allocation5], %s142
        %s144 = sand.u32 %s66, 1
        %s145 = scalar_lea.vmem [#allocation6], %s144
        %p146 = scmp.eq.s32.totalorder %s23, 0
        // Predicated region
        $region29: #{tpu_custom_call.1} parent=23 // pred_check
          %p147 = pneg %p146
        $region30: #{tpu_custom_call.1} parent=23 // pred_check_branch
          %149 = sbr.rel (%p147) target = $region32
        $region31: #{tpu_custom_call.1} parent=23 // pred_region
          %vm150 = vcmask 253952
          %151 = vst.msk [vmem:[#allocation2] sm:$0x1] %vm150, 0.0
        $region32: #{tpu_custom_call.1} parent=23 // pred_fallthru
          _
        %v152 = vld [vmem:[%s128] sm:$0xff]
        %v153 = vld [vmem:[#allocation2] sm:$0x1]
        %vm154 = vcmask 261120
        %v155 = vsel %vm154, %v152, 0.0
        %v156 = vrot.slane %v155, 4
        %v157 = vadd.f32 %v155, %v156
        %v158 = vrot.slane %v157, 2
        %v159 = vadd.f32 %v157, %v158
        %v160 = vrot.slane %v159, 1
        %v161 = vadd.f32 %v159, %v160
        %v162 = vadd.f32 %v153, %v161
        %vm163 = vcmask 253952
        %164 = vst.msk [vmem:[#allocation2] sm:$0x1] %vm163, %v162
        // Predicated region
        $region33: #{tpu_custom_call.1} parent=23 // pred_check
          %p165 = pneg %p146
        $region34: #{tpu_custom_call.1} parent=23 // pred_check_branch
          %167 = sbr.rel (%p165) target = $region36
        $region35: #{tpu_custom_call.1} parent=23 // pred_region
          %v168 = vld [vmem:[#allocation2] sm:$0x1]
          %v169 = vmul.f32 %v168, 0.125
          %170 = vst.msk [vmem:[%s145] sm:$0x1] %vm163, %v169
        $region36: #{tpu_custom_call.1} parent=23 // pred_fallthru
          _
        %s171 = sand.u32 %s66, 1
        %s172 = scalar_lea.sflag [#allocation5], %s171
        %s173 = sand.u32 %s66, 1
        %s174 = scalar_lea.vmem [#allocation6], %s173
        // Predicated region
        $region37: #{tpu_custom_call.1} parent=23 // pred_check
          %p175 = pneg %p76
        $region38: #{tpu_custom_call.1} parent=23 // pred_check_branch
          %177 = sbr.rel (%p175) target = $region40
        $region39: #{tpu_custom_call.1} parent=23 // pred_region
          %s179 = ssub.s32 16, 16
          %180 = vsyncadd %s172, %s179
          %s181 = smul.addr %s22, 16
          %s182 = scalar_lea.hbm %s1, %s181
          %s184 = sshll.u32 %s174, 4
          %s185 = int_to_ptr.vmem [resolvable:$true] %s184
          %187 = dma.vmem_to_hbm [thread:$0]  %s185, 16, %s182, %s172
        $region40: #{tpu_custom_call.1} parent=23 // pred_fallthru
          _
      $region24: #{tpu_custom_call.1} parent=5 // pred_fallthru
        _
      %p188 = scmp.le.s32.totalorder 2, %s13
      // Predicated region
      $region41: #{tpu_custom_call.1} parent=5 // pred_check
        %p189 = pneg %p188
      $region42: #{tpu_custom_call.1} parent=5 // pred_check_branch
        %191 = sbr.rel (%p189) target = $region44
      $region43: #{tpu_custom_call.1} parent=5 // pred_region
        %s192 = ssub.s32 %s13, 2
        // Predicated region
        $region45: #{tpu_custom_call.1} parent=43 // pred_check
          %p193 = pneg %p82
        $region46: #{tpu_custom_call.1} parent=43 // pred_check_branch
          %195 = sbr.rel (%p193) target = $region48
        $region47: #{tpu_custom_call.1} parent=43 // pred_region
          %s196 = sand.u32 %s67, 1
          %s197 = scalar_lea.sflag [#allocation5], %s196
          %s198 = sand.u32 %s67, 1
          %s199 = scalar_lea.vmem [#allocation6], %s198
          %200 = dma.done %s197, 16
        $region48: #{tpu_custom_call.1} parent=43 // pred_fallthru
          _
      $region44: #{tpu_custom_call.1} parent=5 // pred_fallthru
        _
    $region6: #{tpu_custom_call.1} parent=1 // loop_footer
      %s17 = sadd.s32 1, %s13
    $region7: #{tpu_custom_call.1} parent=1 // loop_footer_branch
      %12 = sbr.rel target = $region3
    $region8: #{tpu_custom_call.1} parent=1 // loop_exit
      _
    %201 = vsyncpa [#allocation4], 1
    %s202 = scalar_lea.sflag [#allocation4], 1
    %203 = vsyncpa %s202, 1
    %204 = vsyncpa [#allocation5], 1
    %s205 = scalar_lea.sflag [#allocation5], 1
    %206 = vsyncpa %s205, 1

</llo_original>
